<compile_context>
chip_gen: v6e
topology: v6e:2x2x1
jax: 0.10.0
libtpu: 0.0.40
codegen_flags: <defaults>
</compile_context>

<pallas_src>
import math

import jax
import jax.numpy as jnp
from jax.experimental import pallas as pl
from jax.experimental.pallas import tpu as pltpu


_LANE = 128
_LANE_TILE_TARGET = 2048                 # lanes per block (multiple of 128)
_BLOCK_BYTES_TARGET = 4 * 1024 * 1024    # ~4 MiB per x/out block
_VMEM_LIMIT = 32 * 1024 * 1024           # >= 4 buffers * 4 MiB + bias; safe on v5e/v6e/v7x


# ---------------- kernel ----------------

def _add_bias_kernel(x_ref, b_ref, o_ref):
    # Broadcasting add, computed in the (promoted) output dtype.
    #   2-D blocks: (TR, TL)      + (1, TL)
    #   3-D blocks: (TB, TC, HW)  + (1, TC, 1)
    o_ref[...] = x_ref[...].astype(o_ref.dtype) + b_ref[...].astype(o_ref.dtype)


# ---------------- helpers ----------------

def _sublane_align(dtype):
    # Sub-32-bit dtypes pack along sublanes: f32 -> 8, bf16 -> 16, int8/fp8 -> 32.
    return {4: 8, 2: 16, 1: 32}.get(jnp.dtype(dtype).itemsize, 8)


def _row_tile(n_rows, lane_tile, out_dtype):
    """Rows per block so the block is ~_BLOCK_BYTES_TARGET, sublane-aligned."""
    itemsize = jnp.dtype(out_dtype).itemsize
    align = _sublane_align(out_dtype)
    rows = _BLOCK_BYTES_TARGET // max(lane_tile * itemsize, 1)
    if rows >= n_rows:
        return n_rows                      # full extent is always legal
    return max((rows // align) * align, align)


def _choose_lane_width(total, c):
    """Lane width L for repacking a flat stream of `total` elems whose bias pattern
    repeats every `c` elems: L must be a multiple of lcm(c, 128) and divide total.
    Prefer the largest L that still leaves >= 8 rows (sublane fill)."""
    base = math.lcm(c, _LANE)
    if base > _LANE_TILE_TARGET or total % base != 0:
        return None
    cands = [L for L in range(base, _LANE_TILE_TARGET + 1, base) if total % L == 0]
    good = [L for L in cands if total // L >= 8]
    return max(good) if good else min(cands)


# ---------------- core pallas call ----------------

def _add_row_pattern(x2, brow, out_dtype):
    """x2: (R, L); brow: (1, L). Returns x2 + brow (broadcast over rows)."""
    R, L = x2.shape
    TL = L if L <= _LANE_TILE_TARGET else _LANE_TILE_TARGET
    TR = _row_tile(R, TL, out_dtype)
    n_l = pl.cdiv(L, TL)
    n_r = pl.cdiv(R, TR)
    out_shape = jax.ShapeDtypeStruct((R, L), out_dtype)

    if n_l == 1:
        # Single lane tile: 1-D grid over row tiles; bias block index is constant,
        # so the bias tile is DMA'd once and stays VMEM-resident.
        return pl.pallas_call(
            _add_bias_kernel,
            out_shape=out_shape,
            grid=(n_r,),
            in_specs=[pl.BlockSpec((TR, L), lambda r: (r, 0)),
                      pl.BlockSpec((1, L), lambda r: (0, 0))],
            out_specs=pl.BlockSpec((TR, L), lambda r: (r, 0)),
            compiler_params=pltpu.CompilerParams(
                dimension_semantics=("parallel",),
                vmem_limit_bytes=_VMEM_LIMIT),
        )(x2, brow)

    # Lane-tile axis outermost, rows innermost: the bias tile's block index only
    # changes with the outer axis, so it is not re-DMA'd per row/batch tile.
    return pl.pallas_call(
        _add_bias_kernel,
        out_shape=out_shape,
        grid=(n_l, n_r),
        in_specs=[pl.BlockSpec((TR, TL), lambda l, r: (r, l)),
                  pl.BlockSpec((1, TL), lambda l, r: (0, l))],
        out_specs=pl.BlockSpec((TR, TL), lambda l, r: (r, l)),
        compiler_params=pltpu.CompilerParams(
            dimension_semantics=("parallel", "parallel"),
            vmem_limit_bytes=_VMEM_LIMIT),
    )(x2, brow)


# ---------------- wrappers ----------------

def add_bias_2d(x, bias_c1):
    """x: (N, C); bias_c1: (C, 1) parameter (as stored by the module)."""
    N, C = x.shape
    out_dtype = jnp.result_type(x.dtype, bias_c1.dtype)   # match torch type promotion
    brow = bias_c1.reshape(1, C)                           # bias.t().view(1, -1)

    if C % _LANE != 0:
        L = _choose_lane_width(N * C, C)
        if L is not None:
            # Lane-dense repack: fold logical rows into 128k-wide rows so every
            # store is a full-lane vst; bias pattern repeats every C lanes.
            out = _add_row_pattern(x.reshape(N * C // L, L),
                                   jnp.tile(brow, (1, L // C)),
                                   out_dtype)
            return out.reshape(N, C)
        # TODO(synk): pad / tail-split N*C to a multiple of lcm(C, 128) so this
        # lane-sparse fallback (last dim < 128 -> masked stores) never triggers
        # for large inputs.
    return _add_row_pattern(x, brow, out_dtype)


def add_bias_4d(x, bias_c1):
    """x: (N, C, H, W) NCHW; bias_c1: (C, 1) parameter."""
    N, C, H, W = x.shape
    out_dtype = jnp.result_type(x.dtype, bias_c1.dtype)
    HW = H * W
    S = C * HW

    if S % _LANE == 0:
        # Lane-dense: flatten each sample's (C, H, W) onto the lane axis and add a
        # precomputed per-sample bias slab (1, C*HW). Works even when H*W itself is
        # not a multiple of 128 (7x7, 14x14, 28x28, 56x56 with C % 128 == 0, etc.).
        slab = jnp.broadcast_to(bias_c1.reshape(C, 1), (C, HW)).reshape(1, S)
        out = _add_row_pattern(x.reshape(N, S), slab, out_dtype)
        return out.reshape(N, C, H, W)

    # Fallback: (TB, TC, HW) blocks with HW as the full-extent last dim and a
    # resident (1, TC, 1) bias; batch is folded into the block leading dim so
    # per-step overhead is amortized.
    # TODO(synk): pad HW to a multiple of 128 (or fuse into the producer conv
    # epilogue) if this lane-sparse path shows up on hot shapes.
    x3 = x.reshape(N, C, HW)
    b3 = bias_c1.reshape(1, C, 1)
    itemsize = jnp.dtype(out_dtype).itemsize
    align = _sublane_align(out_dtype)
    if C * HW * itemsize <= _BLOCK_BYTES_TARGET:
        TC = C
    else:
        TC = max((_BLOCK_BYTES_TARGET // (HW * itemsize) // align) * align, align)
        TC = min(TC, C)
    TB = min(N, max(1, _BLOCK_BYTES_TARGET // (TC * HW * itemsize)))
    grid = (pl.cdiv(C, TC), pl.cdiv(N, TB))   # channel tile outer -> bias resident

    out3 = pl.pallas_call(
        _add_bias_kernel,
        out_shape=jax.ShapeDtypeStruct((N, C, HW), out_dtype),
        grid=grid,
        in_specs=[pl.BlockSpec((TB, TC, HW), lambda c, n: (n, c, 0)),
                  pl.BlockSpec((1, TC, 1), lambda c, n: (0, c, 0))],
        out_specs=pl.BlockSpec((TB, TC, HW), lambda c, n: (n, c, 0)),
        compiler_params=pltpu.CompilerParams(
            dimension_semantics=("parallel", "parallel"),
            vmem_limit_bytes=_VMEM_LIMIT),
    )(x3, b3)
    return out3.reshape(N, C, H, W)


def add_bias(x, bias_c1):
    if x.ndim == 2:
        return add_bias_2d(x, bias_c1)
    return add_bias_4d(x, bias_c1)


# ---------------- main ----------------

if __name__ == "__main__":
    key = jax.random.PRNGKey(0)
    k_b, k_x4, k_x2 = jax.random.split(key, 3)

    C = 4
    # Module stores bias.unsqueeze(1) -> (C, 1)
    bias_param = jax.random.normal(k_b, (C, 1), dtype=jnp.float32)

    # 4-D case (NCHW): C*H*W = 1024 -> lane-dense flattened path
    x4 = jax.random.normal(k_x4, (2, C, 16, 16), dtype=jnp.float32)
    y4 = jax.block_until_ready(add_bias(x4, bias_param))
    ref4 = x4 + bias_param.T.reshape(1, C, 1, 1)
    assert y4.shape == x4.shape and y4.dtype == x4.dtype
    assert jnp.allclose(y4, ref4, atol=1e-6)

    # 2-D case (N, C): tiny, full-extent fallback
    x2 = jax.random.normal(k_x2, (2, C), dtype=jnp.float32)
    y2 = jax.block_until_ready(add_bias(x2, bias_param))
    ref2 = x2 + bias_param.T.reshape(1, C)
    assert y2.shape == x2.shape and y2.dtype == x2.dtype
    assert jnp.allclose(y2, ref2, atol=1e-6)

    # 2-D lane-dense repack path (N*C multiple of lcm(C,128)=128)
    x2b = jax.random.normal(jax.random.fold_in(key, 7), (64, C), dtype=jnp.float32)
    y2b = jax.block_until_ready(add_bias(x2b, bias_param))
    assert jnp.allclose(y2b, x2b + bias_param.T.reshape(1, C), atol=1e-6)

    # 4-D fallback path: C*H*W = 196 not a multiple of 128
    x5 = jax.random.normal(jax.random.fold_in(key, 11), (2, C, 7, 7), dtype=jnp.float32)
    y5 = jax.block_until_ready(add_bias(x5, bias_param))
    assert jnp.allclose(y5, x5 + bias_param.T.reshape(1, C, 1, 1), atol=1e-6)

    # Larger-channel 4-D case exercising the multi-lane-tile (lane-outer) grid
    Cb = 256
    bias_big = jax.random.normal(jax.random.fold_in(key, 13), (Cb, 1), dtype=jnp.float32)
    x6 = jax.random.normal(jax.random.fold_in(key, 17), (2, Cb, 16, 16), dtype=jnp.float32)
    y6 = jax.block_until_ready(add_bias(x6, bias_big))
    assert jnp.allclose(y6, x6 + bias_big.T.reshape(1, Cb, 1, 1), atol=1e-6)

    # Mixed-dtype promotion: bf16 activations + f32 parameter -> f32 result (torch rule)
    x7 = jax.random.normal(jax.random.fold_in(key, 19), (2, C, 16, 16),
                           dtype=jnp.bfloat16)
    y7 = jax.block_until_ready(add_bias(x7, bias_param))
    assert y7.dtype == jnp.float32
    assert jnp.allclose(y7, x7.astype(jnp.float32) + bias_param.T.reshape(1, C, 1, 1),
                        atol=1e-6)

    print("KERNEL_OK")
</pallas_src>

<mosaic_0001>
module attributes {stable_mosaic.version = 11 : i64} {
  func.func @_add_bias_kernel(%arg0: i32, %arg1: memref<2x1024xf32, #tpu.memory_space<vmem>>, %arg2: memref<1x1024xf32, #tpu.memory_space<vmem>>, %arg3: memref<2x1024xf32, #tpu.memory_space<vmem>>) attributes {dimension_semantics = [#tpu.dimension_semantics<parallel>], iteration_bounds = array<i64: 1>, scalar_prefetch = 0 : i64, scratch_operands = 0 : i64, tpu.core_type = #tpu.core_type<tc>, window_params = [{transform_indices = @transform_0, window_bounds = array<i64: 2, 1024>}, {pipeline_mode = #tpu.pipeline_mode<synchronous>, transform_indices = @transform_1, window_bounds = array<i64: 1, 1024>}, {transform_indices = @transform_2, window_bounds = array<i64: 2, 1024>}]} {
    %c0 = arith.constant 0 : index
    %c0_0 = arith.constant 0 : index
    %0 = vector.load %arg1[%c0, %c0_0] : memref<2x1024xf32, #tpu.memory_space<vmem>>, vector<2x1024xf32>
    %c0_1 = arith.constant 0 : index
    %c0_2 = arith.constant 0 : index
    %1 = vector.load %arg2[%c0_1, %c0_2] : memref<1x1024xf32, #tpu.memory_space<vmem>>, vector<1x1024xf32>
    %2 = vector.broadcast %1 : vector<1x1024xf32> to vector<2x1024xf32>
    %3 = arith.addf %0, %2 : vector<2x1024xf32>
    %c0_3 = arith.constant 0 : index
    %c0_4 = arith.constant 0 : index
    %4 = vector.load %arg3[%c0_3, %c0_4] : memref<2x1024xf32, #tpu.memory_space<vmem>>, vector<2x1024xf32>
    tpu.vector_store %arg3[%c0_3, %c0_4], %3 {strides = array<i32>} : memref<2x1024xf32, #tpu.memory_space<vmem>>, vector<2x1024xf32>,
    return
  }
  func.func @transform_0(%arg0: i32) -> (i32, i32) {
    %c0_i32 = arith.constant 0 : i32
    %c0_i32_0 = arith.constant 0 : i32
    return %arg0, %c0_i32 : i32, i32
  }
  func.func @transform_1(%arg0: i32) -> (i32, i32) {
    %c0_i32 = arith.constant 0 : i32
    %c0_i32_0 = arith.constant 0 : i32
    %c0_i32_1 = arith.constant 0 : i32
    return %c0_i32, %c0_i32_0 : i32, i32
  }
  func.func @transform_2(%arg0: i32) -> (i32, i32) {
    %c0_i32 = arith.constant 0 : i32
    %c0_i32_0 = arith.constant 0 : i32
    return %arg0, %c0_i32 : i32, i32
  }
}

</mosaic_0001>

<llo_original>
// kernel: tpu_custom_call.1
$region0: #{tpu_custom_call.1}
  #allocation0 [shape = 'u32[]', space=smem, size = 0x4, offset = 0x4, fixed_abs, tag = 'smem constant byte address 0x4 - core index']
  #allocation1 [shape = 'u32[144,128]{1,0:T(1,128)}', space=vmem, size = 0x12000, scoped, tag = 'internal scratch']
  %s0 = inlined_call_operand.hbm [shape: f32[2,1024], index: 0, kind: input, shape index: {}]
  %s1 = inlined_call_operand.hbm [shape: f32[1,1024], index: 1, kind: input, shape index: {}]
  %s2 = inlined_call_operand.hbm [shape: f32[2,1024], index: 2, kind: output, shape index: {}]
  %s3 = sld [smem:[#allocation0]]
  $region26: #{tpu_custom_call.1} parent=0
    _
  %s5 = ssub.s32 1, %s3
  %s6 = scalar_select 0, %s5, %s3
  $region1: #{tpu_custom_call.1} parent=0
    #allocation2 [shape = 'u8[8192]{0}', space=vmem, size = 0x2000, scoped, tag = 'input window, operand 0, single buffered']
    #allocation3 [shape = 's32[1]{0}', space=sflag, size = 0x4, scoped, tag = 'scoped memory for tpu_custom_call.1']
    #allocation4 [shape = 's32[1]{0}', space=sflag, size = 0x4, scoped, tag = 'scoped memory for tpu_custom_call.1']
    #allocation5 [shape = 'u8[4096]{0}', space=vmem, size = 0x1000, scoped, tag = 'input window, operand 1, single buffered']
    #allocation6 [shape = 's32[1]{0}', space=sflag, size = 0x4, scoped, tag = 'scoped memory for tpu_custom_call.1']
    #allocation7 [shape = 'u8[8192]{0}', space=vmem, size = 0x2000, scoped, tag = 'output window, operand 0, single buffered']
    %7 = vsyncpa [#allocation3], 0
    %8 = vsyncpa [#allocation6], 0
    %9 = vsyncpa [#allocation4], 0
    // Predicated region
    $region2: #{tpu_custom_call.1} parent=1 // pred_check
      _
    $region3: #{tpu_custom_call.1} parent=1 // pred_check_branch
      %11 = sbr.rel (0) target = $region5
    $region4: #{tpu_custom_call.1} parent=1 // pred_region
      %s13 = ssub.s32 256, 256
      %14 = vsyncadd [#allocation3], %s13
      %s16 = sshll.u32 [#allocation2], 4
      %s17 = int_to_ptr.vmem [resolvable:$true] %s16
      %19 = dma.hbm_to_vmem [thread:$0]  %s0, 256, %s17, [#allocation3]
    $region5: #{tpu_custom_call.1} parent=1 // pred_fallthru
      _
    // Predicated region
    $region6: #{tpu_custom_call.1} parent=1 // pred_check
      _
    $region7: #{tpu_custom_call.1} parent=1 // pred_check_branch
      %21 = sbr.rel (0) target = $region9
    $region8: #{tpu_custom_call.1} parent=1 // pred_region
      %s23 = ssub.s32 128, 128
      %24 = vsyncadd [#allocation6], %s23
      %s26 = sshll.u32 [#allocation5], 4
      %s27 = int_to_ptr.vmem [resolvable:$true] %s26
      %29 = dma.hbm_to_vmem [thread:$0]  %s1, 128, %s27, [#allocation6]
    $region9: #{tpu_custom_call.1} parent=1 // pred_fallthru
      _
    // Predicated region
    $region10: #{tpu_custom_call.1} parent=1 // pred_check
      _
    $region11: #{tpu_custom_call.1} parent=1 // pred_check_branch
      %31 = sbr.rel (0) target = $region13
    $region12: #{tpu_custom_call.1} parent=1 // pred_region
      %32 = dma.done [#allocation3], 256
    $region13: #{tpu_custom_call.1} parent=1 // pred_fallthru
      _
    // Predicated region
    $region14: #{tpu_custom_call.1} parent=1 // pred_check
      _
    $region15: #{tpu_custom_call.1} parent=1 // pred_check_branch
      %34 = sbr.rel (0) target = $region17
    $region16: #{tpu_custom_call.1} parent=1 // pred_region
      %35 = dma.done [#allocation6], 128
    $region17: #{tpu_custom_call.1} parent=1 // pred_fallthru
      _
    %v36 = vld [vmem:[#allocation2] sm:$0xff]
    %v37 = vld [vmem:[#allocation2 + $0x8] sm:$0xff]
    %v38 = vld [vmem:[#allocation5] sm:$0xff]
    %v40 = vlaneseq
    %v41 = vshrl.u32 %v40, 7
    %v42 = vsub.s32 0, %v41
    %v43 = vrot.slane %v38, %v42
    %v44 = vlaneseq
    %v45 = vshrl.u32 %v44, 7
    %v46 = vsub.s32 1, %v45
    %v47 = vrot.slane %v38, %v46
    %v48 = vlaneseq
    %v49 = vshrl.u32 %v48, 7
    %v50 = vsub.s32 2, %v49
    %v51 = vrot.slane %v38, %v50
    %v52 = vlaneseq
    %v53 = vshrl.u32 %v52, 7
    %v54 = vsub.s32 3, %v53
    %v55 = vrot.slane %v38, %v54
    %v56 = vlaneseq
    %v57 = vshrl.u32 %v56, 7
    %v58 = vsub.s32 4, %v57
    %v59 = vrot.slane %v38, %v58
    %v60 = vlaneseq
    %v61 = vshrl.u32 %v60, 7
    %v62 = vsub.s32 5, %v61
    %v63 = vrot.slane %v38, %v62
    %v64 = vlaneseq
    %v65 = vshrl.u32 %v64, 7
    %v66 = vsub.s32 6, %v65
    %v67 = vrot.slane %v38, %v66
    %v68 = vlaneseq
    %v69 = vshrl.u32 %v68, 7
    %v70 = vsub.s32 7, %v69
    %v71 = vrot.slane %v38, %v70
    %v72 = vcombine.low %v43, %v47
    %v73 = vcombine.low %v51, %v55
    %v75 = vunpack.c.l.s4 1983009808
    %v76 = vunpack.c.0.s8 %v75
    %v77 = vlaneseq
    %v78 = vshrl.u32 %v77, 7
    %v79 = vsub.s32 %v76, %v78
    %v80 = vrot.slane %v72, %v79
    %v82 = vunpack.c.l.s4 1983009808
    %v83 = vunpack.c.0.s8 %v82
    %v84 = vlaneseq
    %v85 = vshrl.u32 %v84, 7
    %v86 = vsub.s32 %v83, %v85
    %v87 = vrot.slane %v73, %v86
    %v88 = vcombine.low %v80, %v87
    %v89 = vcombine.low %v59, %v63
    %v90 = vcombine.low %v67, %v71
    %v92 = vunpack.c.l.s4 1983009808
    %v93 = vunpack.c.0.s8 %v92
    %v94 = vlaneseq
    %v95 = vshrl.u32 %v94, 7
    %v96 = vsub.s32 %v93, %v95
    %v97 = vrot.slane %v89, %v96
    %v99 = vunpack.c.l.s4 1983009808
    %v100 = vunpack.c.0.s8 %v99
    %v101 = vlaneseq
    %v102 = vshrl.u32 %v101, 7
    %v103 = vsub.s32 %v100, %v102
    %v104 = vrot.slane %v90, %v103
    %v105 = vcombine.low %v97, %v104
    %v108 = vadd.f32 %v36, %v88
    %v109 = vadd.f32 %v37, %v105
    %110 = vst [vmem:[#allocation7] sm:$0xff] %v108
    %111 = vst [vmem:[#allocation7 + $0x8] sm:$0xff] %v109
    // Predicated region
    $region18: #{tpu_custom_call.1} parent=1 // pred_check
      _
    $region19: #{tpu_custom_call.1} parent=1 // pred_check_branch
      %113 = sbr.rel (0) target = $region21
    $region20: #{tpu_custom_call.1} parent=1 // pred_region
      %s115 = ssub.s32 256, 256
      %116 = vsyncadd [#allocation4], %s115
      %s118 = sshll.u32 [#allocation7], 4
      %s119 = int_to_ptr.vmem [resolvable:$true] %s118
      %121 = dma.vmem_to_hbm [thread:$0]  %s119, 256, %s2, [#allocation4]
    $region21: #{tpu_custom_call.1} parent=1 // pred_fallthru
      _
    // Predicated region
    $region22: #{tpu_custom_call.1} parent=1 // pred_check
      _
    $region23: #{tpu_custom_call.1} parent=1 // pred_check_branch
      %123 = sbr.rel (0) target = $region25
    $region24: #{tpu_custom_call.1} parent=1 // pred_region
      %124 = dma.done [#allocation4], 256
    $region25: #{tpu_custom_call.1} parent=1 // pred_fallthru
      _
    %125 = vsyncpa [#allocation3], 1
    %126 = vsyncpa [#allocation6], 1
    %127 = vsyncpa [#allocation4], 1

</llo_original>
